<compile_context>
chip_gen: v5e
topology: v5e:2x2
jax: 0.10.0
libtpu: 0.0.40
codegen_flags: <defaults>
</compile_context>

<pallas_src>
import functools

import jax
import jax.numpy as jnp
import numpy as np
from jax.experimental import pallas as pl
from jax.experimental.pallas import tpu as pltpu

_LANES = 128
_TILE_R = 1024                          # rows per grid step on the tiled path
_FUSED_LIMIT_BYTES = 6 * 1024 * 1024    # take the single-pass path below this
_TINY = 1e-30                           # guards 1/tao when gt == est everywhere
_FUSED_PARAMS = pltpu.CompilerParams(vmem_limit_bytes=32 * 1024 * 1024)


# ---------------------------------------------------------------------------
# Fused single-pass kernels (whole problem resident in VMEM)
# ---------------------------------------------------------------------------
def _fused_sum_kernel(gt_ref, est_ref, sum_ref):
    d = jnp.abs(gt_ref[...].astype(jnp.float32) - est_ref[...].astype(jnp.float32))
    tao = 0.2 * jnp.max(d)
    inv_2tao = 0.5 / jnp.maximum(tao, jnp.float32(_TINY))   # scalar divide, hoisted
    r = jnp.where(d <= tao, d, d * d * inv_2tao + 0.5 * tao)
    sum_ref[0, 0] = jnp.sum(r)


def _fused_elem_kernel(gt_ref, est_ref, out_ref):
    d = jnp.abs(gt_ref[...].astype(jnp.float32) - est_ref[...].astype(jnp.float32))
    tao = 0.2 * jnp.max(d)
    inv_2tao = 0.5 / jnp.maximum(tao, jnp.float32(_TINY))
    out_ref[...] = jnp.where(d <= tao, d, d * d * inv_2tao + 0.5 * tao)


# ---------------------------------------------------------------------------
# Tiled kernels (large inputs) — per-tile partial reductions, parallel grid.
# `total_rows` / `need_mask` are static (bound with functools.partial); the
# mask zeroes rows of the ragged last tile (OOB reads are unspecified values).
# Masked d = 0 contributes nothing to either max or sum (res(0) = 0).
# ---------------------------------------------------------------------------
def _tile_max_kernel(gt_ref, est_ref, pmax_ref, *, total_rows, need_mask):
    d = jnp.abs(gt_ref[...].astype(jnp.float32) - est_ref[...].astype(jnp.float32))
    if need_mask:
        row = jax.lax.broadcasted_iota(jnp.int32, (_TILE_R, _LANES), 0)
        valid = row + pl.program_id(0) * _TILE_R < total_rows
        d = jnp.where(valid, d, 0.0)
    pmax_ref[...] = jnp.max(d, axis=0, keepdims=True).reshape(1, 1, _LANES)


def _tile_sum_kernel(maxd_ref, gt_ref, est_ref, psum_ref, *, total_rows, need_mask):
    tao = 0.2 * maxd_ref[0, 0]
    inv_2tao = 0.5 / jnp.maximum(tao, jnp.float32(_TINY))
    half_tao = 0.5 * tao
    d = jnp.abs(gt_ref[...].astype(jnp.float32) - est_ref[...].astype(jnp.float32))
    if need_mask:
        row = jax.lax.broadcasted_iota(jnp.int32, (_TILE_R, _LANES), 0)
        valid = row + pl.program_id(0) * _TILE_R < total_rows
        d = jnp.where(valid, d, 0.0)
    r = jnp.where(d <= tao, d, d * d * inv_2tao + half_tao)
    psum_ref[...] = jnp.sum(r, axis=0, keepdims=True).reshape(1, 1, _LANES)


def _tile_elem_kernel(maxd_ref, gt_ref, est_ref, out_ref):
    # No mask needed: out-of-bounds output rows are discarded on write.
    tao = 0.2 * maxd_ref[0, 0]
    inv_2tao = 0.5 / jnp.maximum(tao, jnp.float32(_TINY))
    half_tao = 0.5 * tao
    d = jnp.abs(gt_ref[...].astype(jnp.float32) - est_ref[...].astype(jnp.float32))
    out_ref[...] = jnp.where(d <= tao, d, d * d * inv_2tao + half_tao)


# ---------------------------------------------------------------------------
# Wrapper helpers
# ---------------------------------------------------------------------------
def _flatten_128(x):
    """Flatten to (R, 128); pad with zeros only if numel % 128 != 0."""
    flat = jnp.ravel(x)
    n = flat.shape[0]
    n128 = ((n + _LANES - 1) // _LANES) * _LANES
    if n128 != n:
        flat = jnp.pad(flat, (0, n128 - n))   # padded zeros: d=0 -> no effect
    return flat.reshape(n128 // _LANES, _LANES)


def _berhu_fused(gt2d, est2d, reduction, out_dtype, orig_shape, n):
    R = gt2d.shape[0]
    full_in = [pl.BlockSpec((R, _LANES), lambda i: (0, 0)),
               pl.BlockSpec((R, _LANES), lambda i: (0, 0))]

    if reduction == "none":
        out2d = pl.pallas_call(
            _fused_elem_kernel,
            out_shape=jax.ShapeDtypeStruct((R, _LANES), jnp.float32),
            grid=(1,),
            in_specs=full_in,
            out_specs=pl.BlockSpec((R, _LANES), lambda i: (0, 0)),
            compiler_params=_FUSED_PARAMS,
        )(gt2d, est2d)
        return out2d.reshape(-1)[:n].reshape(orig_shape).astype(out_dtype)

    total = pl.pallas_call(
        _fused_sum_kernel,
        out_shape=jax.ShapeDtypeStruct((1, 1), jnp.float32),
        grid=(1,),
        in_specs=full_in,
        out_specs=pl.BlockSpec((1, 1), lambda i: (0, 0), memory_space=pltpu.SMEM),
        compiler_params=_FUSED_PARAMS,
    )(gt2d, est2d)

    loss = total[0, 0] if reduction == "sum" else total[0, 0] / jnp.float32(n)
    return loss.astype(out_dtype)


def _berhu_tiled(gt2d, est2d, reduction, out_dtype, orig_shape, n):
    R = gt2d.shape[0]
    num_tiles = (R + _TILE_R - 1) // _TILE_R
    need_mask = (R % _TILE_R) != 0
    grid = (num_tiles,)

    row_spec = pl.BlockSpec((_TILE_R, _LANES), lambda i: (i, 0))
    partial_spec = pl.BlockSpec((1, 1, _LANES), lambda i: (i, 0, 0))
    maxd_spec = pl.BlockSpec(memory_space=pltpu.SMEM)
    parallel = pltpu.CompilerParams(dimension_semantics=("parallel",))

    # Pass 1: per-tile partial max of |gt - est| (lane-dense partials, both TCs).
    pmax = pl.pallas_call(
        functools.partial(_tile_max_kernel, total_rows=R, need_mask=need_mask),
        out_shape=jax.ShapeDtypeStruct((num_tiles, 1, _LANES), jnp.float32),
        grid=grid,
        in_specs=[row_spec, row_spec],
        out_specs=partial_spec,
        compiler_params=parallel,
    )(gt2d, est2d)
    max_delta = jnp.max(pmax).reshape(1, 1)   # tiny final reduce in XLA

    if reduction == "none":
        out2d = pl.pallas_call(
            _tile_elem_kernel,
            out_shape=jax.ShapeDtypeStruct((R, _LANES), jnp.float32),
            grid=grid,
            in_specs=[maxd_spec, row_spec, row_spec],
            out_specs=row_spec,
            compiler_params=parallel,
        )(max_delta, gt2d, est2d)
        return out2d.reshape(-1)[:n].reshape(orig_shape).astype(out_dtype)

    # Pass 2: per-tile partial sums of the BerHu values.
    psum = pl.pallas_call(
        functools.partial(_tile_sum_kernel, total_rows=R, need_mask=need_mask),
        out_shape=jax.ShapeDtypeStruct((num_tiles, 1, _LANES), jnp.float32),
        grid=grid,
        in_specs=[maxd_spec, row_spec, row_spec],
        out_specs=partial_spec,
        compiler_params=parallel,
    )(max_delta, gt2d, est2d)
    total = jnp.sum(psum)

    loss = total if reduction == "sum" else total / jnp.float32(n)
    return loss.astype(out_dtype)


def berhu_loss(gt, est, reduction="mean", force_tiled=False):
    if reduction not in ("mean", "sum", "none"):
        raise ValueError(f"unknown reduction: {reduction}")

    orig_shape = gt.shape
    n = int(np.prod(orig_shape)) if len(orig_shape) > 0 else 1
    out_dtype = jnp.result_type(gt.dtype, est.dtype)
    if not jnp.issubdtype(out_dtype, jnp.floating):
        out_dtype = jnp.float32

    gt2d = _flatten_128(gt)
    est2d = _flatten_128(est)

    # Estimated VMEM footprint of the fused single-pass path.
    n128 = gt2d.shape[0] * _LANES
    fused_bytes = n128 * (jnp.dtype(gt.dtype).itemsize + jnp.dtype(est.dtype).itemsize)
    if reduction == "none":
        fused_bytes += n128 * 4

    if (not force_tiled) and fused_bytes <= _FUSED_LIMIT_BYTES:
        return _berhu_fused(gt2d, est2d, reduction, out_dtype, orig_shape, n)
    return _berhu_tiled(gt2d, est2d, reduction, out_dtype, orig_shape, n)


# ---------------------------------------------------------------------------
# Pure-JAX reference for verification
# ---------------------------------------------------------------------------
def berhu_loss_ref(gt, est, reduction="mean"):
    delta = jnp.abs(gt.astype(jnp.float32) - est.astype(jnp.float32))
    tao = 0.2 * jnp.max(delta)
    res = jnp.where(delta <= tao, delta, 0.5 * delta ** 2 / tao + 0.5 * tao)
    if reduction == "none":
        return res
    if reduction == "mean":
        return jnp.mean(res)
    return jnp.sum(res)


if __name__ == "__main__":
    key = jax.random.PRNGKey(0)
    k1, k2, k3, k4, k5, k6 = jax.random.split(key, 6)

    # --- small NCHW input (fused single-pass path) ---------------------------
    gt = jax.random.uniform(k1, (2, 4, 16, 16), dtype=jnp.float32) * 255.0
    est = jax.random.uniform(k2, (2, 4, 16, 16), dtype=jnp.float32) * 255.0

    for red in ("mean", "sum", "none"):
        out = jax.block_until_ready(berhu_loss(gt, est, reduction=red))
        ref = berhu_loss_ref(gt, est, red)
        assert np.allclose(np.asarray(out), np.asarray(ref), rtol=1e-4, atol=1e-4), red

    # --- larger, evenly tiled input forced through the 2-pass parallel path --
    gt_l = jax.random.uniform(k3, (4, 4, 128, 128), dtype=jnp.float32) * 255.0
    est_l = jax.random.uniform(k4, (4, 4, 128, 128), dtype=jnp.float32) * 255.0

    t_mean = jax.block_until_ready(berhu_loss(gt_l, est_l, reduction="mean", force_tiled=True))
    t_none = jax.block_until_ready(berhu_loss(gt_l, est_l, reduction="none", force_tiled=True))
    assert np.allclose(np.asarray(t_mean), np.asarray(berhu_loss_ref(gt_l, est_l, "mean")), rtol=1e-4)
    assert np.allclose(np.asarray(t_none), np.asarray(berhu_loss_ref(gt_l, est_l, "none")),
                       rtol=1e-4, atol=1e-4)

    # --- ragged input (lane pad + masked last tile) forced through tiled path -
    gt_r = jax.random.uniform(k5, (4, 4, 120, 100), dtype=jnp.float32) * 255.0
    est_r = jax.random.uniform(k6, (4, 4, 120, 100), dtype=jnp.float32) * 255.0

    r_mean = jax.block_until_ready(berhu_loss(gt_r, est_r, reduction="mean", force_tiled=True))
    r_sum = jax.block_until_ready(berhu_loss(gt_r, est_r, reduction="sum", force_tiled=True))
    assert np.allclose(np.asarray(r_mean), np.asarray(berhu_loss_ref(gt_r, est_r, "mean")), rtol=1e-4)
    assert np.allclose(np.asarray(r_sum), np.asarray(berhu_loss_ref(gt_r, est_r, "sum")), rtol=1e-4)

    print("KERNEL_OK")
</pallas_src>

<mosaic_0001>
module attributes {stable_mosaic.version = 11 : i64} {
  func.func @_fused_sum_kernel(%arg0: i32, %arg1: memref<16x128xf32, #tpu.memory_space<vmem>>, %arg2: memref<16x128xf32, #tpu.memory_space<vmem>>, %arg3: memref<1x1xf32, #tpu.memory_space<smem>>) attributes {dimension_semantics = [#tpu.dimension_semantics<arbitrary>], iteration_bounds = array<i64: 1>, scalar_prefetch = 0 : i64, scratch_operands = 0 : i64, tpu.core_type = #tpu.core_type<tc>, window_params = [{pipeline_mode = #tpu.pipeline_mode<synchronous>, transform_indices = @transform_0, window_bounds = array<i64: 16, 128>}, {pipeline_mode = #tpu.pipeline_mode<synchronous>, transform_indices = @transform_1, window_bounds = array<i64: 16, 128>}, {transform_indices = @transform_2, window_bounds = array<i64: 1, 1>}]} {
    %c0 = arith.constant 0 : index
    %c0_0 = arith.constant 0 : index
    %0 = vector.load %arg1[%c0, %c0_0] : memref<16x128xf32, #tpu.memory_space<vmem>>, vector<16x128xf32>
    %c0_1 = arith.constant 0 : index
    %c0_2 = arith.constant 0 : index
    %1 = vector.load %arg2[%c0_1, %c0_2] : memref<16x128xf32, #tpu.memory_space<vmem>>, vector<16x128xf32>
    %2 = arith.subf %0, %1 : vector<16x128xf32>
    %3 = math.absf %2 : vector<16x128xf32>
    %4 = vector.shape_cast %3 : vector<16x128xf32> to vector<1x16x128xf32>
    %cst = arith.constant dense<0xFF800000> : vector<1xf32>
    %5 = vector.multi_reduction <maximumf>, %4, %cst [1, 2] : vector<1x16x128xf32> to vector<1xf32>
    %6 = vector.shape_cast %5 : vector<1xf32> to vector<1x1x1xf32>
    %7 = vector.extract %6[0, 0, 0] : f32 from vector<1x1x1xf32>
    %cst_3 = arith.constant 2.000000e-01 : f32
    %8 = arith.mulf %cst_3, %7 : f32
    %cst_4 = arith.constant 1.000000e-30 : f32
    %9 = arith.maximumf %8, %cst_4 : f32
    %cst_5 = arith.constant 5.000000e-01 : f32
    %10 = arith.divf %cst_5, %9 : f32
    %11 = vector.broadcast %8 : f32 to vector<16x128xf32>
    %12 = arith.cmpf ole, %3, %11 : vector<16x128xf32>
    %13 = arith.mulf %3, %3 : vector<16x128xf32>
    %14 = vector.broadcast %10 : f32 to vector<16x128xf32>
    %15 = arith.mulf %13, %14 : vector<16x128xf32>
    %cst_6 = arith.constant 5.000000e-01 : f32
    %16 = arith.mulf %cst_6, %8 : f32
    %17 = vector.broadcast %16 : f32 to vector<16x128xf32>
    %18 = arith.addf %15, %17 : vector<16x128xf32>
    %19 = arith.select %12, %3, %18 : vector<16x128xi1>, vector<16x128xf32>
    %20 = vector.shape_cast %19 : vector<16x128xf32> to vector<1x16x128xf32>
    %cst_7 = arith.constant dense<0.000000e+00> : vector<1xf32>
    %21 = vector.multi_reduction <add>, %20, %cst_7 [1, 2] : vector<1x16x128xf32> to vector<1xf32>
    %22 = vector.shape_cast %21 : vector<1xf32> to vector<1x1x1xf32>
    %23 = vector.extract %22[0, 0, 0] : f32 from vector<1x1x1xf32>
    %c0_8 = arith.constant 0 : index
    %c0_9 = arith.constant 0 : index
    %24 = memref.load %arg3[%c0_8, %c0_9] : memref<1x1xf32, #tpu.memory_space<smem>>
    memref.store %23, %arg3[%c0_8, %c0_9] : memref<1x1xf32, #tpu.memory_space<smem>>
    return
  }
  func.func @transform_0(%arg0: i32) -> (i32, i32) {
    %c0_i32 = arith.constant 0 : i32
    %c0_i32_0 = arith.constant 0 : i32
    %c0_i32_1 = arith.constant 0 : i32
    return %c0_i32, %c0_i32_0 : i32, i32
  }
  func.func @transform_1(%arg0: i32) -> (i32, i32) {
    %c0_i32 = arith.constant 0 : i32
    %c0_i32_0 = arith.constant 0 : i32
    %c0_i32_1 = arith.constant 0 : i32
    return %c0_i32, %c0_i32_0 : i32, i32
  }
  func.func @transform_2(%arg0: i32) -> (i32, i32) {
    %c0_i32 = arith.constant 0 : i32
    %c0_i32_0 = arith.constant 0 : i32
    %c0_i32_1 = arith.constant 0 : i32
    return %c0_i32, %c0_i32_0 : i32, i32
  }
}

</mosaic_0001>

<llo_original>
// kernel: tpu_custom_call.1
$region0: #{tpu_custom_call.1}
  #allocation0 [shape = 'u32[]', space=smem, size = 0x4, offset = 0x4, fixed_abs, tag = 'smem constant byte address 0x4 - core index']
  #allocation1 [shape = 'u32[72,128]{1,0:T(1,128)}', space=vmem, size = 0x9000, scoped, tag = 'internal scratch']
  %s0 = inlined_call_operand.hbm [shape: f32[16,128], index: 0, kind: input, shape index: {}]
  %s1 = inlined_call_operand.hbm [shape: f32[16,128], index: 1, kind: input, shape index: {}]
  %s2 = inlined_call_operand.hbm [shape: f32[1,1], index: 2, kind: output, shape index: {}]
  %s3 = sld [smem:[#allocation0]]
  $region26: #{tpu_custom_call.1} parent=0
    _
  %s5 = ssub.s32 1, %s3
  %s6 = scalar_select 0, %s5, %s3
  $region1: #{tpu_custom_call.1} parent=0
    #allocation2 [shape = 'u8[8192]{0}', space=vmem, size = 0x2000, scoped, tag = 'input window, operand 0, single buffered']
    #allocation3 [shape = 's32[1]{0}', space=sflag, size = 0x4, scoped, tag = 'scoped memory for tpu_custom_call.1']
    #allocation4 [shape = 's32[1]{0}', space=sflag, size = 0x4, scoped, tag = 'scoped memory for tpu_custom_call.1']
    #allocation5 [shape = 'u8[8192]{0}', space=vmem, size = 0x2000, scoped, tag = 'input window, operand 1, single buffered']
    #allocation6 [shape = 's32[1]{0}', space=sflag, size = 0x4, scoped, tag = 'scoped memory for tpu_custom_call.1']
    #allocation7 [shape = 'u8[512]{0}', space=smem, size = 0x200, scoped, tag = 'output window, operand 0, single buffered']
    %7 = vsyncpa [#allocation3], 0
    %8 = vsyncpa [#allocation6], 0
    %9 = vsyncpa [#allocation4], 0
    // Predicated region
    $region2: #{tpu_custom_call.1} parent=1 // pred_check
      _
    $region3: #{tpu_custom_call.1} parent=1 // pred_check_branch
      %11 = sbr.rel (0) target = $region5
    $region4: #{tpu_custom_call.1} parent=1 // pred_region
      %13 = vsyncadd [#allocation3], 0
      %s14 = sshll.u32 %s0, 4
      %s15 = int_to_ptr.hbm [resolvable:$true] %s14
      %s16 = sshll.u32 [#allocation2], 4
      %s17 = int_to_ptr.vmem [resolvable:$true] %s16
      %22 = dma.hbm_to_vmem [thread:$0]  %s15, 256, %s17, [#allocation3], 128, 128, 8
    $region5: #{tpu_custom_call.1} parent=1 // pred_fallthru
      _
    // Predicated region
    $region6: #{tpu_custom_call.1} parent=1 // pred_check
      _
    $region7: #{tpu_custom_call.1} parent=1 // pred_check_branch
      %24 = sbr.rel (0) target = $region9
    $region8: #{tpu_custom_call.1} parent=1 // pred_region
      %26 = vsyncadd [#allocation6], 0
      %s27 = sshll.u32 %s1, 4
      %s28 = int_to_ptr.hbm [resolvable:$true] %s27
      %s29 = sshll.u32 [#allocation5], 4
      %s30 = int_to_ptr.vmem [resolvable:$true] %s29
      %35 = dma.hbm_to_vmem [thread:$0]  %s28, 256, %s30, [#allocation6], 128, 128, 8
    $region9: #{tpu_custom_call.1} parent=1 // pred_fallthru
      _
    // Predicated region
    $region10: #{tpu_custom_call.1} parent=1 // pred_check
      _
    $region11: #{tpu_custom_call.1} parent=1 // pred_check_branch
      %37 = sbr.rel (0) target = $region13
    $region12: #{tpu_custom_call.1} parent=1 // pred_region
      %39 = dma.done [#allocation3], 256
    $region13: #{tpu_custom_call.1} parent=1 // pred_fallthru
      _
    // Predicated region
    $region14: #{tpu_custom_call.1} parent=1 // pred_check
      _
    $region15: #{tpu_custom_call.1} parent=1 // pred_check_branch
      %41 = sbr.rel (0) target = $region17
    $region16: #{tpu_custom_call.1} parent=1 // pred_region
      %43 = dma.done [#allocation6], 256
    $region17: #{tpu_custom_call.1} parent=1 // pred_fallthru
      _
    %v44 = vld [vmem:[#allocation2] sm:$0xff]
    %v45 = vld [vmem:[#allocation2 + $0x8] sm:$0xff]
    %v46 = vld [vmem:[#allocation5] sm:$0xff]
    %v47 = vld [vmem:[#allocation5 + $0x8] sm:$0xff]
    %v48 = vsub.f32 %v44, %v46
    %v49 = vsub.f32 %v45, %v47
    %v50 = vand.u32 2147483647, %v48
    %v51 = vand.u32 2147483647, %v49
    %v52 = vmax.f32 %v50, %v51
    %53 = vmax.xlane.f32.xlu0 %v52
    %v54 = vpop.xlane.xlu0 %53
    %v55 = vrot.slane %v54, 4
    %v56 = vmax.f32 %v54, %v55
    %v57 = vrot.slane %v56, 2
    %v58 = vmax.f32 %v56, %v57
    %v59 = vrot.slane %v58, 1
    %v60 = vmax.f32 %v58, %v59
    %s61 = vtos %v60
    %s62 = smul.f32 %s61, 0.2
    %s63 = smax.f32 %s62, 1e-30
    %v64 = vstv %s63
    %v65 = vrcp.pop %v64
    %v66 = vmul.f32 %v64, %v65
    %v67 = vsub.f32 1.0, %v66
    %v68 = vmul.f32 %v65, %v67
    %v69 = vadd.f32 %v65, %v68
    %vm70 = vweird.f32 %v64
    %vm71 = vweird.f32 %v65
    %vm72 = vmor %vm70, %vm71
    %v73 = vsel %vm72, %v65, %v69
    %v74 = vand.u32 2147483647, %v64
    %vm75 = vcmp.eq.f32.partialorder %v74, 8.507059e+37
    %v76 = vand.u32 %v64, 2147483648
    %v77 = vor.u32 1.1754944e-38, %v76
    %v78 = vsel %vm75, %v77, %v73
    %s79 = vtos %v78
    %s80 = smul.f32 0.5, %s79
    %v81 = vstv %s62
    %vm82 = vcmp.le.f32.partialorder %v50, %v81
    %vm83 = vcmp.le.f32.partialorder %v51, %v81
    %v84 = vmul.f32 %v50, %v50
    %v85 = vmul.f32 %v51, %v51
    %v86 = vstv %s80
    %v87 = vmul.f32 %v84, %v86
    %v88 = vmul.f32 %v85, %v86
    %s89 = smul.f32 %s62, 0.5
    %v90 = vstv %s89
    %v91 = vadd.f32 %v87, %v90
    %v92 = vadd.f32 %v88, %v90
    %v93 = vsel %vm82, %v50, %v91
    %v94 = vsel %vm83, %v51, %v92
    %v95 = vadd.f32 %v93, %v94
    %96 = vadd.xlane.f32.xlu0 %v95
    %v97 = vpop.xlane.xlu0 %96
    %v98 = vrot.slane %v97, 4
    %v99 = vadd.f32 %v97, %v98
    %v100 = vrot.slane %v99, 2
    %v101 = vadd.f32 %v99, %v100
    %v102 = vrot.slane %v101, 1
    %v103 = vadd.f32 %v101, %v102
    %s104 = vtos %v103
    %s105 = scalar_lea.smem [#allocation7], 0
    %106 = sst [smem:[%s105]] %s104
    // Predicated region
    $region18: #{tpu_custom_call.1} parent=1 // pred_check
      _
    $region19: #{tpu_custom_call.1} parent=1 // pred_check_branch
      %108 = sbr.rel (0) target = $region21
    $region20: #{tpu_custom_call.1} parent=1 // pred_region
      %110 = vsyncadd [#allocation4], 0
      %s112 = sshll.u32 %s2, 4
      %s113 = int_to_ptr.hbm [resolvable:$true] %s112
      %115 = dma.smem_to_hbm [#allocation7], 16, %s113, [#allocation4]
    $region21: #{tpu_custom_call.1} parent=1 // pred_fallthru
      _
    // Predicated region
    $region22: #{tpu_custom_call.1} parent=1 // pred_check
      _
    $region23: #{tpu_custom_call.1} parent=1 // pred_check_branch
      %117 = sbr.rel (0) target = $region25
    $region24: #{tpu_custom_call.1} parent=1 // pred_region
      %119 = dma.done [#allocation4], 16
    $region25: #{tpu_custom_call.1} parent=1 // pred_fallthru
      _
    %120 = sfence
    %121 = vsyncpa [#allocation3], 1
    %122 = vsyncpa [#allocation6], 1
    %123 = vsyncpa [#allocation4], 1

</llo_original>
